<compile_context>
chip_gen: v7x
topology: tpu7x:2x2x1
jax: 0.10.0
libtpu: 0.0.40
codegen_flags: <defaults>
</compile_context>

<pallas_src>
import jax
import jax.numpy as jnp
from jax.experimental import pallas as pl
from jax.experimental.pallas import tpu as pltpu


_LANES = 128      # vreg lane width
_SUBLANES = 8     # vreg sublane count (f32)


def _cdiv(a, b):
    return -(-a // b)


def _wrapper_kernel(p_ref, x_ref, o_ref):
    """Compute bin/line channels for one (1, 3, R, 128) spatial tile.

    p_ref: SMEM (8,) f32 = [w00, w01, w02, b0, w30, w31, w32, b3]
           (normalization already folded into the weights/biases).
    x_ref: VMEM (1, 3, R, 128) input tile (native dtype; cast in-kernel).
    o_ref: VMEM (1, 2, R, 128) f32 tile (row 0 = bin, row 1 = sigmoid(line)).
    """
    # Dense (R, 128) channel planes -> full 8x128 vregs per load/store.
    x0 = x_ref[0, 0, :, :].astype(jnp.float32)
    x1 = x_ref[0, 1, :, :].astype(jnp.float32)
    x2 = x_ref[0, 2, :, :].astype(jnp.float32)

    bin_out = x0 * p_ref[0] + x1 * p_ref[1] + x2 * p_ref[2] + p_ref[3]
    z = x0 * p_ref[4] + x1 * p_ref[5] + x2 * p_ref[6] + p_ref[7]
    # sigmoid(z) = 1 / (1 + exp(-z)); exp + approximate reciprocal both run on
    # the EUP slot (rel. err ~2^-12, negligible for a detection score map).
    line_out = pl.reciprocal(1.0 + jnp.exp(-z), approx=True)

    o_ref[0, 0, :, :] = bin_out
    o_ref[0, 1, :, :] = line_out


def model_wrapper_single_text_detection(x, mean, std, weight, bias,
                                        *, max_rows_per_tile=2048):
    """x: (B, 3, H, W) image tensor (keep native dtype: uint8/bf16/f32).
    Returns (B, 2, H, W) f32.

    Semantics identical to the PyTorch module:
      y   = Conv1x1(weight, bias)( (x/255 - mean) / std )
      out = stack([y[:, 0], sigmoid(y[:, 3])], dim=1)
    """
    B, C, H, W = x.shape
    assert C == 3, "RGBNormalizeLayer expects 3 input channels"
    HW = H * W

    # ---- Fold normalization into the two needed output channels (0 and 3) ---
    mean_f = mean.astype(jnp.float32).reshape(-1)
    std_f = std.astype(jnp.float32).reshape(-1)
    stdinv = 1.0 / std_f
    w_sel = weight[jnp.array([0, 3]), :].astype(jnp.float32)      # (2, 3)
    b_sel = bias[jnp.array([0, 3])].astype(jnp.float32)           # (2,)
    w_fold = w_sel * (stdinv / 255.0)[None, :]                    # (2, 3)
    b_fold = b_sel - w_sel @ (mean_f * stdinv)                    # (2,)
    params = jnp.concatenate(
        [w_fold[0], b_fold[0:1], w_fold[1], b_fold[1:2]]
    ).astype(jnp.float32)                                         # (8,) SMEM

    # ---- Spatial tiling: sublane-dense (rows, 128) layout -------------------
    rows = _cdiv(HW, _LANES)

    if rows <= max_rows_per_tile:
        r_tile, n_t = rows, 1              # full-extent block (no /8 needed)
    else:
        r_tile = max(_SUBLANES, (max_rows_per_tile // _SUBLANES) * _SUBLANES)
        n_t = _cdiv(rows, r_tile)

    # v7x has 2 TensorCores sharing HBM: guarantee >= 2 grid steps.
    if B * n_t == 1 and rows > _SUBLANES:
        r_tile = _cdiv(_cdiv(rows, 2), _SUBLANES) * _SUBLANES
        n_t = _cdiv(rows, r_tile)

    rows_pad = r_tile * n_t
    HW_pad = rows_pad * _LANES

    # No dtype conversion here -- keep native dtype, cast inside the kernel.
    x_flat = x.reshape(B, C, HW)
    if HW_pad != HW:
        # One extra pass only when the spatial size is not tile-aligned; keeps
        # every kernel store a full unmasked vst and the tail tile well-defined.
        x_flat = jnp.pad(x_flat, ((0, 0), (0, 0), (0, HW_pad - HW)))
    x4 = x_flat.reshape(B, C, rows_pad, _LANES)

    out = pl.pallas_call(
        _wrapper_kernel,
        out_shape=jax.ShapeDtypeStruct((B, 2, rows_pad, _LANES), jnp.float32),
        grid_spec=pltpu.PrefetchScalarGridSpec(
            num_scalar_prefetch=0,
            grid=(B, n_t),
            in_specs=[
                # Folded weights/biases: tiny untiled SMEM array.
                pl.BlockSpec(memory_space=pltpu.MemorySpace.SMEM),
                # Per-(batch, spatial-tile) dense input block.
                pl.BlockSpec((1, C, r_tile, _LANES), lambda b, t: (b, 0, t, 0)),
            ],
            out_specs=pl.BlockSpec((1, 2, r_tile, _LANES),
                                   lambda b, t: (b, 0, t, 0)),
        ),
        compiler_params=pltpu.CompilerParams(
            dimension_semantics=("parallel", "parallel"),
            # ~10 MiB double-buffered working set at r_tile=2048 (f32 input);
            # raise the scoped limit explicitly so v5e's 16 MiB default and
            # v7x's 64 MiB physical VMEM are both handled safely.
            vmem_limit_bytes=32 * 1024 * 1024,
        ),
    )(params, x4)

    out = out.reshape(B, 2, HW_pad)
    if HW_pad != HW:
        out = out[:, :, :HW]
    return out.reshape(B, 2, H, W)


def _reference(x, mean, std, weight, bias):
    """Pure-JAX reference mirroring the PyTorch forward exactly."""
    xf = x.astype(jnp.float32)
    xn = (xf / 255.0 - mean.reshape(1, -1, 1, 1)) / std.reshape(1, -1, 1, 1)
    y = jnp.einsum('oc,bchw->bohw', weight, xn) + bias.reshape(1, -1, 1, 1)
    bin_out = y[:, 0, :, :]
    line_out = jax.nn.sigmoid(y[:, 3, :, :])
    return jnp.stack([bin_out, line_out], axis=1)


def _check(out, ref):
    # bin channel is exact fp32 math; line channel uses the EUP approximate
    # reciprocal (rel. err ~2^-12), so it gets a slightly looser tolerance.
    assert jnp.allclose(out[:, 0], ref[:, 0], atol=1e-4, rtol=1e-5), \
        float(jnp.max(jnp.abs(out[:, 0] - ref[:, 0])))
    assert jnp.allclose(out[:, 1], ref[:, 1], atol=2e-3, rtol=2e-3), \
        float(jnp.max(jnp.abs(out[:, 1] - ref[:, 1])))


if __name__ == "__main__":
    C_in, C_out = 3, 4

    key = jax.random.PRNGKey(0)
    kx, kw, kb, kx2 = jax.random.split(key, 4)

    # deterministic RGB normalization constants (ImageNet-style)
    mean = jnp.array([0.485, 0.456, 0.406], jnp.float32)
    std = jnp.array([0.229, 0.224, 0.225], jnp.float32)

    # deterministic synthetic 1x1-conv "model" parameters
    weight = jax.random.normal(kw, (C_out, C_in), jnp.float32) * 0.1
    bias = jax.random.normal(kb, (C_out,), jnp.float32) * 0.1

    # --- primary small case: B=2, 3x16x16, single full-extent tile ----------
    B, H, W = 2, 16, 16
    x = jax.random.uniform(kx, (B, C_in, H, W), jnp.float32, 0.0, 255.0)
    out = model_wrapper_single_text_detection(x, mean, std, weight, bias)
    out = jax.block_until_ready(out)
    assert out.shape == (B, 2, H, W), out.shape
    _check(out, _reference(x, mean, std, weight, bias))

    # --- second case exercising the multi-tile + padded-tail path -----------
    H2, W2 = 40, 52                      # HW=2080 -> 17 rows of 128 lanes
    x2 = jax.random.uniform(kx2, (B, C_in, H2, W2), jnp.float32, 0.0, 255.0)
    out2 = model_wrapper_single_text_detection(
        x2, mean, std, weight, bias, max_rows_per_tile=8)   # 3 tiles + padding
    out2 = jax.block_until_ready(out2)
    assert out2.shape == (B, 2, H2, W2), out2.shape
    _check(out2, _reference(x2, mean, std, weight, bias))

    print("KERNEL_OK")
</pallas_src>

<mosaic_0001>
module attributes {stable_mosaic.version = 11 : i64} {
  func.func @_wrapper_kernel(%arg0: i32, %arg1: i32, %arg2: memref<8xf32, #tpu.memory_space<smem>>, %arg3: memref<1x3x2x128xf32, #tpu.memory_space<vmem>>, %arg4: memref<1x2x2x128xf32, #tpu.memory_space<vmem>>) attributes {dimension_semantics = [#tpu.dimension_semantics<parallel>, #tpu.dimension_semantics<parallel>], iteration_bounds = array<i64: 2, 1>, scalar_prefetch = 0 : i64, scratch_operands = 0 : i64, tpu.core_type = #tpu.core_type<tc>, window_params = [{transform_indices = @transform_0, window_bounds = array<i64: 8>}, {transform_indices = @transform_1, window_bounds = array<i64: 1, 3, 2, 128>}, {transform_indices = @transform_2, window_bounds = array<i64: 1, 2, 2, 128>}]} {
    %c0 = arith.constant 0 : index
    %c0_0 = arith.constant 0 : index
    %c0_1 = arith.constant 0 : index
    %c0_2 = arith.constant 0 : index
    %0 = vector.load %arg3[%c0, %c0_0, %c0_1, %c0_2] : memref<1x3x2x128xf32, #tpu.memory_space<vmem>>, vector<1x1x2x128xf32>
    %1 = vector.shape_cast %0 : vector<1x1x2x128xf32> to vector<2x128xf32>
    %c0_3 = arith.constant 0 : index
    %c1 = arith.constant 1 : index
    %c0_4 = arith.constant 0 : index
    %c0_5 = arith.constant 0 : index
    %2 = vector.load %arg3[%c0_3, %c1, %c0_4, %c0_5] : memref<1x3x2x128xf32, #tpu.memory_space<vmem>>, vector<1x1x2x128xf32>
    %3 = vector.shape_cast %2 : vector<1x1x2x128xf32> to vector<2x128xf32>
    %c0_6 = arith.constant 0 : index
    %c2 = arith.constant 2 : index
    %c0_7 = arith.constant 0 : index
    %c0_8 = arith.constant 0 : index
    %4 = vector.load %arg3[%c0_6, %c2, %c0_7, %c0_8] : memref<1x3x2x128xf32, #tpu.memory_space<vmem>>, vector<1x1x2x128xf32>
    %5 = vector.shape_cast %4 : vector<1x1x2x128xf32> to vector<2x128xf32>
    %c0_9 = arith.constant 0 : index
    %6 = memref.load %arg2[%c0_9] : memref<8xf32, #tpu.memory_space<smem>>
    %7 = vector.broadcast %6 : f32 to vector<2x128xf32>
    %8 = arith.mulf %1, %7 : vector<2x128xf32>
    %c1_10 = arith.constant 1 : index
    %9 = memref.load %arg2[%c1_10] : memref<8xf32, #tpu.memory_space<smem>>
    %10 = vector.broadcast %9 : f32 to vector<2x128xf32>
    %11 = arith.mulf %3, %10 : vector<2x128xf32>
    %12 = arith.addf %8, %11 : vector<2x128xf32>
    %c2_11 = arith.constant 2 : index
    %13 = memref.load %arg2[%c2_11] : memref<8xf32, #tpu.memory_space<smem>>
    %14 = vector.broadcast %13 : f32 to vector<2x128xf32>
    %15 = arith.mulf %5, %14 : vector<2x128xf32>
    %16 = arith.addf %12, %15 : vector<2x128xf32>
    %c3 = arith.constant 3 : index
    %17 = memref.load %arg2[%c3] : memref<8xf32, #tpu.memory_space<smem>>
    %18 = vector.broadcast %17 : f32 to vector<2x128xf32>
    %19 = arith.addf %16, %18 : vector<2x128xf32>
    %c4 = arith.constant 4 : index
    %20 = memref.load %arg2[%c4] : memref<8xf32, #tpu.memory_space<smem>>
    %21 = vector.broadcast %20 : f32 to vector<2x128xf32>
    %22 = arith.mulf %1, %21 : vector<2x128xf32>
    %c5 = arith.constant 5 : index
    %23 = memref.load %arg2[%c5] : memref<8xf32, #tpu.memory_space<smem>>
    %24 = vector.broadcast %23 : f32 to vector<2x128xf32>
    %25 = arith.mulf %3, %24 : vector<2x128xf32>
    %26 = arith.addf %22, %25 : vector<2x128xf32>
    %c6 = arith.constant 6 : index
    %27 = memref.load %arg2[%c6] : memref<8xf32, #tpu.memory_space<smem>>
    %28 = vector.broadcast %27 : f32 to vector<2x128xf32>
    %29 = arith.mulf %5, %28 : vector<2x128xf32>
    %30 = arith.addf %26, %29 : vector<2x128xf32>
    %c7 = arith.constant 7 : index
    %31 = memref.load %arg2[%c7] : memref<8xf32, #tpu.memory_space<smem>>
    %32 = vector.broadcast %31 : f32 to vector<2x128xf32>
    %33 = arith.addf %30, %32 : vector<2x128xf32>
    %cst = arith.constant 0.000000e+00 : f32
    %34 = vector.broadcast %cst : f32 to vector<2x128xf32>
    %35 = arith.subf %34, %33 : vector<2x128xf32>
    %36 = math.exp %35 : vector<2x128xf32>
    %cst_12 = arith.constant 1.000000e+00 : f32
    %37 = vector.broadcast %cst_12 : f32 to vector<2x128xf32>
    %38 = arith.addf %37, %36 : vector<2x128xf32>
    %39 = tpu.reciprocal %38 {approx = true} : vector<2x128xf32> -> vector<2x128xf32>
    %c0_13 = arith.constant 0 : index
    %c0_14 = arith.constant 0 : index
    %c0_15 = arith.constant 0 : index
    %c0_16 = arith.constant 0 : index
    %40 = vector.load %arg4[%c0_13, %c0_14, %c0_15, %c0_16] : memref<1x2x2x128xf32, #tpu.memory_space<vmem>>, vector<1x1x2x128xf32>
    %41 = vector.shape_cast %40 : vector<1x1x2x128xf32> to vector<2x128xf32>
    %42 = vector.shape_cast %19 : vector<2x128xf32> to vector<1x1x2x128xf32>
    tpu.vector_store %arg4[%c0_13, %c0_14, %c0_15, %c0_16], %42 {strides = array<i32>} : memref<1x2x2x128xf32, #tpu.memory_space<vmem>>, vector<1x1x2x128xf32>,
    %c0_17 = arith.constant 0 : index
    %c1_18 = arith.constant 1 : index
    %c0_19 = arith.constant 0 : index
    %c0_20 = arith.constant 0 : index
    %43 = vector.load %arg4[%c0_17, %c1_18, %c0_19, %c0_20] : memref<1x2x2x128xf32, #tpu.memory_space<vmem>>, vector<1x1x2x128xf32>
    %44 = vector.shape_cast %43 : vector<1x1x2x128xf32> to vector<2x128xf32>
    %45 = vector.shape_cast %39 : vector<2x128xf32> to vector<1x1x2x128xf32>
    tpu.vector_store %arg4[%c0_17, %c1_18, %c0_19, %c0_20], %45 {strides = array<i32>} : memref<1x2x2x128xf32, #tpu.memory_space<vmem>>, vector<1x1x2x128xf32>,
    return
  }
  func.func @transform_0(%arg0: i32, %arg1: i32) -> i32 {
    %c0_i32 = arith.constant 0 : i32
    %c0_i32_0 = arith.constant 0 : i32
    return %c0_i32 : i32
  }
  func.func @transform_1(%arg0: i32, %arg1: i32) -> (i32, i32, i32, i32) {
    %c0_i32 = arith.constant 0 : i32
    %c0_i32_0 = arith.constant 0 : i32
    %c0_i32_1 = arith.constant 0 : i32
    return %arg0, %c0_i32, %arg1, %c0_i32_0 : i32, i32, i32, i32
  }
  func.func @transform_2(%arg0: i32, %arg1: i32) -> (i32, i32, i32, i32) {
    %c0_i32 = arith.constant 0 : i32
    %c0_i32_0 = arith.constant 0 : i32
    %c0_i32_1 = arith.constant 0 : i32
    return %arg0, %c0_i32, %arg1, %c0_i32_0 : i32, i32, i32, i32
  }
}

</mosaic_0001>

<llo_original>
// kernel: tpu_custom_call.1
$region0: #{tpu_custom_call.1}
  #allocation0 [shape = 'u32[]', space=smem, size = 0x4, offset = 0x4, fixed_abs, tag = 'smem constant byte address 0x4 - core index']
  #allocation1 [shape = 'u32[144,128]{1,0:T(1,128)}', space=vmem, size = 0x12000, scoped, tag = 'internal scratch']
  %s0 = inlined_call_operand.hbm [shape: f32[8], index: 0, kind: input, shape index: {}]
  %s1 = inlined_call_operand.hbm [shape: f32[2,3,2,128], index: 1, kind: input, shape index: {}]
  %s2 = inlined_call_operand.hbm [shape: f32[2,2,2,128], index: 2, kind: output, shape index: {}]
  %s3 = sld [smem:[#allocation0]]
  $region49: #{tpu_custom_call.1} parent=0
    _
  %s5 = ssub.s32 1, %s3
  %s6 = scalar_select 0, %s5, %s3
  $region1: #{tpu_custom_call.1} parent=0
    #allocation2 [shape = 'u8[512]{0}', space=smem, size = 0x200, scoped, tag = 'input window, operand 0, single buffered']
    #allocation3 [shape = 's32[2]{0}', space=sflag, size = 0x8, scoped, tag = 'scoped memory for tpu_custom_call.1']
    #allocation4 [shape = 's32[2]{0}', space=sflag, size = 0x8, scoped, tag = 'scoped memory for tpu_custom_call.1']
    #allocation5 [shape = 's32[2]{0}', space=sflag, size = 0x8, scoped, tag = 'scoped memory for tpu_custom_call.1']
    #allocation6 [shape = 'u8[6144]{0}', space=vmem, size = 0x1800, scoped, tag = 'input window, operand 1']
    #allocation7 [shape = 'u8[4096]{0}', space=vmem, size = 0x1000, scoped, tag = 'output window, operand 0']
    %7 = vsyncpa [#allocation5], 0
    %8 = vsyncpa [#allocation3], 0
    %s9 = scalar_lea.sflag [#allocation3], 1
    %10 = vsyncpa %s9, 0
    %11 = vsyncpa [#allocation4], 0
    %s12 = scalar_lea.sflag [#allocation4], 1
    %13 = vsyncpa %s12, 0
    loop: start=0, step=1, limit=4
    $region2: #{tpu_custom_call.1} parent=1 // loop_pre_header
      _
    $region3: #{tpu_custom_call.1} parent=1 // loop_header
      %s15 = sphi 0, %s19
      %p16 = scmp.ge.s32.totalorder %s15, 4
      %s22 = sphi 0, %s34
      %s23 = sphi 0, %s30
      %s24 = sphi 0, %s22
      %s25 = sphi 0, %s23
      %s26 = sphi 0, %s24
      %s27 = sphi 0, %s25
      %s35 = sphi 0, %s35
      %s37 = sphi 0, %s35
      %s38 = sphi 0, %s37
      %s52 = sphi 0, %s38
      %s60 = sphi 0, %s62
      %s63 = sphi 0, %s60
      %s64 = sphi 0, %s63
      %s80 = sphi 0, %s64
      %s88 = sphi 0, %s90
      %s91 = sphi 0, %s88
      %s92 = sphi 0, %s91
      %s108 = sphi 0, %s92
    $region4: #{tpu_custom_call.1} parent=1 // loop_header_branch
      %18 = sbr.rel (%p16) target = $region8
    $region5: #{tpu_custom_call.1} parent=1 // loop_body
      %s20 = ssub.s32 %s15, 1
      %s21 = ssub.s32 %s15, 2
      %s28 = sadd.s32 1, %s23
      %p29 = scmp.ge.s32.totalorder %s28, 1
      %s30 = scalar_select %p29, 0, %s28
      %s31 = sadd.s32 1, %s22
      %s32 = scalar_select %p29, %s31, %s22
      %p33 = scmp.ge.s32.totalorder %s32, 2
      %s34 = scalar_select %p33, 0, %s32
      %s36 = sadd.s32 %s35, 1
      %p39 = scmp.eq.s32.totalorder %s15, 1
      %p40 = scmp.ne.s32.totalorder %s35, %s37
      %p41 = scmp.eq.s32.totalorder %s15, 0
      %p42 = por %p40, %p41
      %p43 = scmp.ne.s32.totalorder %s35, %s37
      %p44 = scmp.eq.s32.totalorder %s20, 1
      %p45 = por %p43, %p44
      %p46 = scmp.ne.s32.totalorder %s37, %s38
      %p47 = scmp.eq.s32.totalorder %s20, 0
      %p48 = por %p46, %p47
      %p49 = scmp.ne.s32.totalorder %s37, %s38
      %p50 = scmp.eq.s32.totalorder %s21, 1
      %p51 = por %p49, %p50
      %p53 = scmp.ne.s32.totalorder %s38, %s52
      %p54 = scmp.eq.s32.totalorder %s21, 0
      %p55 = por %p53, %p54
      %s56 = ssub.s32 %s22, %s34
      %s57 = ssub.s32 %s23, %s30
      %s58 = sor.u32 %s56, %s57
      %p59 = scmp.eq.s32.totalorder %s58, 0
      %s61 = sadd.s32 %s60, 1
      %s62 = scalar_select %p59, %s60, %s61
      %p65 = pneg %p59
      %p66 = scmp.eq.s32.totalorder %s15, 1
      %p67 = por %p65, %p66
      %p68 = scmp.ne.s32.totalorder %s60, %s63
      %p69 = scmp.eq.s32.totalorder %s15, 0
      %p70 = por %p68, %p69
      %p71 = scmp.ne.s32.totalorder %s60, %s63
      %p72 = scmp.eq.s32.totalorder %s20, 1
      %p73 = por %p71, %p72
      %p74 = scmp.ne.s32.totalorder %s63, %s64
      %p75 = scmp.eq.s32.totalorder %s20, 0
      %p76 = por %p74, %p75
      %p77 = scmp.ne.s32.totalorder %s63, %s64
      %p78 = scmp.eq.s32.totalorder %s21, 1
      %p79 = por %p77, %p78
      %p81 = scmp.ne.s32.totalorder %s64, %s80
      %p82 = scmp.eq.s32.totalorder %s21, 0
      %p83 = por %p81, %p82
      %s84 = ssub.s32 %s22, %s34
      %s85 = ssub.s32 %s23, %s30
      %s86 = sor.u32 %s84, %s85
      %p87 = scmp.eq.s32.totalorder %s86, 0
      %s89 = sadd.s32 %s88, 1
      %s90 = scalar_select %p87, %s88, %s89
      %p93 = pneg %p87
      %p94 = scmp.eq.s32.totalorder %s15, 1
      %p95 = por %p93, %p94
      %p96 = scmp.ne.s32.totalorder %s88, %s91
      %p97 = scmp.eq.s32.totalorder %s15, 0
      %p98 = por %p96, %p97
      %p99 = scmp.ne.s32.totalorder %s88, %s91
      %p100 = scmp.eq.s32.totalorder %s20, 1
      %p101 = por %p99, %p100
      %p102 = scmp.ne.s32.totalorder %s91, %s92
      %p103 = scmp.eq.s32.totalorder %s20, 0
      %p104 = por %p102, %p103
      %p105 = scmp.ne.s32.totalorder %s91, %s92
      %p106 = scmp.eq.s32.totalorder %s21, 1
      %p107 = por %p105, %p106
      %p109 = scmp.ne.s32.totalorder %s92, %s108
      %p110 = scmp.eq.s32.totalorder %s21, 0
      %p111 = por %p109, %p110
      %p112 = scmp.le.s32.totalorder 1, %s15
      %p113 = scmp.lt.s32.totalorder %s15, 3
      %p114 = pnand %p112, %p113
      %p115 = pneg %p114
      // Predicated region
      $region9: #{tpu_custom_call.1} parent=5 // pred_check
        _
      $region10: #{tpu_custom_call.1} parent=5 // pred_check_branch
        %117 = sbr.rel (%p114) target = $region12
      $region11: #{tpu_custom_call.1} parent=5 // pred_region
        %s118 = ssub.s32 %s15, 1
        // Predicated region
        $region13: #{tpu_custom_call.1} parent=11 // pred_check
          %p119 = pneg %p48
        $region14: #{tpu_custom_call.1} parent=11 // pred_check_branch
          %121 = sbr.rel (%p119) target = $region16
        $region15: #{tpu_custom_call.1} parent=11 // pred_region
          %s123 = ssub.s32 16, 16
          %124 = vsyncadd [#allocation5], %s123
          %127 = dma.hbm_to_smem %s0, 16, [#allocation2], [#allocation5]
        $region16: #{tpu_custom_call.1} parent=11 // pred_fallthru
          _
      $region12: #{tpu_custom_call.1} parent=5 // pred_fallthru
        _
      %p128 = scmp.lt.s32.totalorder %s15, 2
      // Predicated region
      $region17: #{tpu_custom_call.1} parent=5 // pred_check
        %p129 = pneg %p128
      $region18: #{tpu_custom_call.1} parent=5 // pred_check_branch
        %131 = sbr.rel (%p129) target = $region20
      $region19: #{tpu_custom_call.1} parent=5 // pred_region
        // Predicated region
        $region21: #{tpu_custom_call.1} parent=19 // pred_check
          %p132 = pneg %p70
        $region22: #{tpu_custom_call.1} parent=19 // pred_check_branch
          %134 = sbr.rel (%p132) target = $region24
        $region23: #{tpu_custom_call.1} parent=19 // pred_region
          %s135 = sand.u32 %s60, 1
          %s136 = scalar_lea.sflag [#allocation3], %s135
          %s137 = sand.u32 %s60, 1
          %s138 = smul.addr %s137, 6
          %s139 = scalar_lea.vmem [#allocation6], %s138
          %s141 = ssub.s32 96, 96
          %142 = vsyncadd %s136, %s141
          %s143 = smul.addr %s22, 3
          %s144 = sadd.s32 %s23, %s143
          %s145 = smul.addr %s144, 32
          %s146 = scalar_lea.hbm %s1, %s145
          %s147 = sshll.u32 %s139, 4
          %s148 = int_to_ptr.vmem [resolvable:$true] %s147
          %153 = dma.hbm_to_vmem [thread:$0]  %s146, 96, %s148, %s136, 32, 32, 2
        $region24: #{tpu_custom_call.1} parent=19 // pred_fallthru
          _
      $region20: #{tpu_custom_call.1} parent=5 // pred_fallthru
        _
      %p154 = scmp.le.s32.totalorder 1, %s15
      %p155 = scmp.lt.s32.totalorder %s15, 3
      %p156 = pnand %p154, %p155
      %p157 = pneg %p156
      // Predicated region
      $region25: #{tpu_custom_call.1} parent=5 // pred_check
        _
      $region26: #{tpu_custom_call.1} parent=5 // pred_check_branch
        %159 = sbr.rel (%p156) target = $region28
      $region27: #{tpu_custom_call.1} parent=5 // pred_region
        %s160 = ssub.s32 %s15, 1
        // Predicated region
        $region29: #{tpu_custom_call.1} parent=27 // pred_check
          %p161 = pneg %p48
        $region30: #{tpu_custom_call.1} parent=27 // pred_check_branch
          %163 = sbr.rel (%p161) target = $region32
        $region31: #{tpu_custom_call.1} parent=27 // pred_region
          %164 = dma.done [#allocation5], 16
        $region32: #{tpu_custom_call.1} parent=27 // pred_fallthru
          _
        %s165 = sand.u32 %s63, 1
        %s166 = scalar_lea.sflag [#allocation3], %s165
        %s167 = sand.u32 %s63, 1
        %s168 = smul.addr %s167, 6
        %s169 = scalar_lea.vmem [#allocation6], %s168
        // Predicated region
        $region33: #{tpu_custom_call.1} parent=27 // pred_check
          %p170 = pneg %p76
        $region34: #{tpu_custom_call.1} parent=27 // pred_check_branch
          %172 = sbr.rel (%p170) target = $region36
        $region35: #{tpu_custom_call.1} parent=27 // pred_region
          %173 = dma.done %s166, 96
        $region36: #{tpu_custom_call.1} parent=27 // pred_fallthru
          _
        %174 = sfence
        %p175 = pneg %p48
        %p176 = pneg %p45
        %s177 = sand.u32 %s63, 1
        %s178 = scalar_lea.sflag [#allocation3], %s177
        %s179 = sand.u32 %s63, 1
        %s180 = smul.addr %s179, 6
        %s181 = scalar_lea.vmem [#allocation6], %s180
        %p182 = pneg %p76
        %p183 = pneg %p73
        %p184 = pneg %p104
        %p185 = pneg %p101
        %s186 = sand.u32 %s91, 1
        %s187 = scalar_lea.sflag [#allocation4], %s186
        %s188 = sand.u32 %s91, 1
        %s189 = smul.addr %s188, 4
        %s190 = scalar_lea.vmem [#allocation7], %s189
        %v191 = vld [vmem:[%s169] sm:$0x3]
        %s192 = scalar_lea.vmem %s169, 2 [#allocation6]
        %v193 = vld [vmem:[%s192] sm:$0x3]
        %s194 = scalar_lea.vmem %s169, 4 [#allocation6]
        %v195 = vld [vmem:[%s194] sm:$0x3]
        %s196 = sld [smem:[#allocation2]]
        %v197 = vstv %s196
        %v198 = vmul.f32 %v191, %v197
        %s199 = sld [smem:[#allocation2 + $0x1]]
        %v200 = vstv %s199
        %v201 = vmul.f32 %v193, %v200
        %v202 = vadd.f32 %v198, %v201
        %s203 = sld [smem:[#allocation2 + $0x2]]
        %v204 = vstv %s203
        %v205 = vmul.f32 %v195, %v204
        %v206 = vadd.f32 %v202, %v205
        %s207 = sld [smem:[#allocation2 + $0x3]]
        %v208 = vstv %s207
        %v209 = vadd.f32 %v206, %v208
        %s210 = sld [smem:[#allocation2 + $0x4]]
        %v211 = vstv %s210
        %v212 = vmul.f32 %v191, %v211
        %s213 = sld [smem:[#allocation2 + $0x5]]
        %v214 = vstv %s213
        %v215 = vmul.f32 %v193, %v214
        %v216 = vadd.f32 %v212, %v215
        %s217 = sld [smem:[#allocation2 + $0x6]]
        %v218 = vstv %s217
        %v219 = vmul.f32 %v195, %v218
        %v220 = vadd.f32 %v216, %v219
        %s221 = sld [smem:[#allocation2 + $0x7]]
        %v222 = vstv %s221
        %v223 = vadd.f32 %v220, %v222
        %v224 = vsub.f32 0.0, %v223
        %v225 = vmul.f32 %v224, 1.442695
        %v226 = vpow.pop %v225
        %v227 = vadd.f32 %v226, 1.0
        %v228 = vrcp.pop %v227
        %229 = vst [vmem:[%s190] sm:$0x3] %v209
        %s230 = scalar_lea.vmem %s190, 2 [#allocation7]
        %231 = vst [vmem:[%s230] sm:$0x3] %v228
        %s232 = sand.u32 %s91, 1
        %s233 = scalar_lea.sflag [#allocation4], %s232
        %s234 = sand.u32 %s91, 1
        %s235 = smul.addr %s234, 4
        %s236 = scalar_lea.vmem [#allocation7], %s235
        // Predicated region
        $region37: #{tpu_custom_call.1} parent=27 // pred_check
          %p237 = pneg %p101
        $region38: #{tpu_custom_call.1} parent=27 // pred_check_branch
          %239 = sbr.rel (%p237) target = $region40
        $region39: #{tpu_custom_call.1} parent=27 // pred_region
          %s241 = ssub.s32 64, 64
          %242 = vsyncadd %s233, %s241
          %s243 = smul.addr %s24, 2
          %s244 = sadd.s32 %s25, %s243
          %s245 = smul.addr %s244, 32
          %s246 = scalar_lea.hbm %s2, %s245
          %s247 = sshll.u32 %s236, 4
          %s248 = int_to_ptr.vmem [resolvable:$true] %s247
          %253 = dma.vmem_to_hbm [thread:$0]  %s248, 64, %s246, %s233, 32, 32, 2
        $region40: #{tpu_custom_call.1} parent=27 // pred_fallthru
          _
      $region28: #{tpu_custom_call.1} parent=5 // pred_fallthru
        _
      %p254 = scmp.le.s32.totalorder 2, %s15
      // Predicated region
      $region41: #{tpu_custom_call.1} parent=5 // pred_check
        %p255 = pneg %p254
      $region42: #{tpu_custom_call.1} parent=5 // pred_check_branch
        %257 = sbr.rel (%p255) target = $region44
      $region43: #{tpu_custom_call.1} parent=5 // pred_region
        %s258 = ssub.s32 %s15, 2
        // Predicated region
        $region45: #{tpu_custom_call.1} parent=43 // pred_check
          %p259 = pneg %p107
        $region46: #{tpu_custom_call.1} parent=43 // pred_check_branch
          %261 = sbr.rel (%p259) target = $region48
        $region47: #{tpu_custom_call.1} parent=43 // pred_region
          %s262 = sand.u32 %s92, 1
          %s263 = scalar_lea.sflag [#allocation4], %s262
          %s264 = sand.u32 %s92, 1
          %s265 = smul.addr %s264, 4
          %s266 = scalar_lea.vmem [#allocation7], %s265
          %267 = dma.done %s263, 64
        $region48: #{tpu_custom_call.1} parent=43 // pred_fallthru
          _
      $region44: #{tpu_custom_call.1} parent=5 // pred_fallthru
        _
    $region6: #{tpu_custom_call.1} parent=1 // loop_footer
      %s19 = sadd.s32 1, %s15
    $region7: #{tpu_custom_call.1} parent=1 // loop_footer_branch
      %14 = sbr.rel target = $region3
    $region8: #{tpu_custom_call.1} parent=1 // loop_exit
      _
    %268 = vsyncpa [#allocation3], 1
    %s269 = scalar_lea.sflag [#allocation3], 1
    %270 = vsyncpa %s269, 1
    %271 = vsyncpa [#allocation4], 1
    %s272 = scalar_lea.sflag [#allocation4], 1
    %273 = vsyncpa %s272, 1
    %274 = vsyncpa [#allocation5], 1
    %s275 = scalar_lea.sflag [#allocation5], 1
    %276 = vsyncpa %s275, 1

</llo_original>
